<compile_context>
chip_gen: v7x
topology: tpu7x:2x2x1
jax: 0.10.0
libtpu: 0.0.40
codegen_flags: <defaults>
</compile_context>

<pallas_src>
import functools

import jax
import jax.numpy as jnp
from jax.experimental import pallas as pl
from jax.experimental.pallas import tpu as pltpu

SELU_ALPHA = 1.6732632423543772
SELU_SCALE = 1.0507009873554805


def _cdiv(a, b):
    return -(-a // b)


def _round_up(n, m):
    return _cdiv(n, m) * m


def _selu(x):
    # scale * (max(0,x) + min(0, alpha*(exp(x)-1))); exp argument clamped so the
    # unselected branch never produces inf (robust if ever differentiated).
    return SELU_SCALE * jnp.where(
        x > 0, x, SELU_ALPHA * (jnp.exp(jnp.minimum(x, 0.0)) - 1.0))


def _softplus(x):
    # Matches torch.nn.functional.softplus (beta=1, threshold=20).
    return jnp.where(x > 20.0, x, jnp.log1p(jnp.exp(jnp.minimum(x, 20.0))))


def encoder_vae_kernel(x_ref, w1_ref, b1_ref, w2_ref, b2_ref,
                       wmu_ref, bmu_ref, ws_ref, bs_ref,
                       mu_ref, sigma_ref):
    x = x_ref[...]                                            # [tile_rows, P*D]

    # h1 = selu(x @ W1blk + b1)                               -> [tile_rows, P*K]
    h1 = jnp.dot(x, w1_ref[...], preferred_element_type=jnp.float32) + b1_ref[...]
    h1 = _selu(h1)

    # h2 = selu(h1 @ W2blk + b2)                              -> [tile_rows, P*K]
    h2 = jnp.dot(h1, w2_ref[...], preferred_element_type=jnp.float32) + b2_ref[...]
    h2 = _selu(h2)

    # Heads: per-sample mu / softplus(sigma), packed along lanes.
    mu = jnp.dot(h2, wmu_ref[...], preferred_element_type=jnp.float32) + bmu_ref[...]
    mu_ref[...] = mu.astype(mu_ref.dtype)

    s = jnp.dot(h2, ws_ref[...], preferred_element_type=jnp.float32) + bs_ref[...]
    sigma_ref[...] = _softplus(s).astype(sigma_ref.dtype)


@functools.partial(jax.jit, static_argnames=("tile_samples",))
def encoder_vae_forward(x, params, tile_samples=32768):
    """x: [B, data_dim] f32. params: PyTorch-style weights [out, in], biases [out].

    Returns (mu, sigma), each [B, z_dim] float32.
    """
    B, D = x.shape
    K = params["w1"].shape[0]
    z = params["wmu"].shape[0]

    # Samples packed per row (lane axis width = P*D; exactly 128 for D=16).
    P = 128 // D if (D <= 128 and 128 % D == 0) else 8

    # Pad the batch only up to a multiple of P (no-op / no extra HBM pass when
    # B is already aligned, which is the common case).
    Bp = _round_up(B, P)
    if Bp != B:
        x = jnp.concatenate([x, jnp.zeros((Bp - B, D), x.dtype)], axis=0)
    R = Bp // P
    xp = x.reshape(R, P * D)                  # contiguous (free) reshape

    # Block-diagonal per-sample weights in [in, out] orientation + packed biases.
    eye = jnp.eye(P, dtype=x.dtype)
    w1b = jnp.kron(eye, params["w1"].T)       # [P*D, P*K]
    w2b = jnp.kron(eye, params["w2"].T)       # [P*K, P*K]
    wmb = jnp.kron(eye, params["wmu"].T)      # [P*K, P*z]
    wsb = jnp.kron(eye, params["ws"].T)       # [P*K, P*z]
    b1p = jnp.tile(params["b1"], P)[None, :]  # [1, P*K]
    b2p = jnp.tile(params["b2"], P)[None, :]
    bmp = jnp.tile(params["bmu"], P)[None, :]  # [1, P*z]
    bsp = jnp.tile(params["bs"], P)[None, :]

    # Row-tile selection: big tiles to amortize per-grid-step overhead, >= 2
    # steps when possible (v7x dual TensorCore), partial tail block instead of
    # rounding the batch up to the tile size.
    if R <= 8:
        tile_rows = R                          # single full-array block
    else:
        tile_rows = max(8, (tile_samples // P) // 8 * 8)
        tile_rows = min(tile_rows, _round_up(_cdiv(R, 2), 8))
    grid = (_cdiv(R, tile_rows),)

    const = lambda i: (0, 0)
    mu_p, sg_p = pl.pallas_call(
        encoder_vae_kernel,
        out_shape=(jax.ShapeDtypeStruct((R, P * z), jnp.float32),
                   jax.ShapeDtypeStruct((R, P * z), jnp.float32)),
        grid=grid,
        in_specs=[
            pl.BlockSpec((tile_rows, P * D), lambda i: (i, 0)),   # x tile (pipelined)
            pl.BlockSpec((P * D, P * K), const),                  # W1 block-diag
            pl.BlockSpec((1, P * K), const),                      # b1
            pl.BlockSpec((P * K, P * K), const),                  # W2 block-diag
            pl.BlockSpec((1, P * K), const),                      # b2
            pl.BlockSpec((P * K, P * z), const),                  # Wmu block-diag
            pl.BlockSpec((1, P * z), const),                      # bmu
            pl.BlockSpec((P * K, P * z), const),                  # Wsigma block-diag
            pl.BlockSpec((1, P * z), const),                      # bsigma
        ],
        out_specs=(pl.BlockSpec((tile_rows, P * z), lambda i: (i, 0)),
                   pl.BlockSpec((tile_rows, P * z), lambda i: (i, 0))),
        compiler_params=pltpu.CompilerParams(
            dimension_semantics=("parallel",),
            vmem_limit_bytes=48 * 1024 * 1024),
    )(xp, w1b, b1p, w2b, b2p, wmb, bmp, wsb, bsp)

    mu = mu_p.reshape(Bp, z)                   # free contiguous reshapes
    sigma = sg_p.reshape(Bp, z)
    if Bp != B:
        mu, sigma = mu[:B], sigma[:B]
    return mu, sigma


def init_params(key, data_dim, z_dim, K=8):
    """PyTorch-Linear-style init; weights [out, in], biases [out]."""
    keys = jax.random.split(key, 8)

    def linear(kw, kb, fan_in, fan_out):
        bound = 1.0 / float(jnp.sqrt(fan_in))
        w = jax.random.uniform(kw, (fan_out, fan_in), jnp.float32, -bound, bound)
        b = jax.random.uniform(kb, (fan_out,), jnp.float32, -bound, bound)
        return w, b

    w1, b1 = linear(keys[0], keys[1], data_dim, K)
    w2, b2 = linear(keys[2], keys[3], K, K)
    wmu, bmu = linear(keys[4], keys[5], K, z_dim)
    ws, bs = linear(keys[6], keys[7], K, z_dim)
    return {"w1": w1, "b1": b1, "w2": w2, "b2": b2,
            "wmu": wmu, "bmu": bmu, "ws": ws, "bs": bs}


def reference_forward(x, p):
    """Pure-JAX reference (high-precision dots) for correctness checking."""
    hp = "highest"
    h1 = jax.nn.selu(jnp.dot(x, p["w1"].T, precision=hp) + p["b1"])
    h2 = jax.nn.selu(jnp.dot(h1, p["w2"].T, precision=hp) + p["b2"])
    mu = jnp.dot(h2, p["wmu"].T, precision=hp) + p["bmu"]
    sigma = jax.nn.softplus(jnp.dot(h2, p["ws"].T, precision=hp) + p["bs"])
    return mu, sigma


if __name__ == "__main__":
    key = jax.random.PRNGKey(0)
    k_p, k_a, k_b, k_c = jax.random.split(key, 4)

    data_dim, z_dim, K = 16, 4, 8
    params = init_params(k_p, data_dim, z_dim, K)

    # Small deterministic checks: aligned batch (single block), multi-step grid
    # with a partial tail block, and a batch that needs pad-to-multiple-of-8.
    for kx, B in ((k_a, 8), (k_b, 200), (k_c, 52)):
        x = jax.random.normal(kx, (B, data_dim), dtype=jnp.float32)
        mu, sigma = encoder_vae_forward(x, params)
        jax.block_until_ready((mu, sigma))

        mu_ref, sigma_ref = reference_forward(x, params)
        assert mu.shape == (B, z_dim) and sigma.shape == (B, z_dim)
        # Tolerance covers possible reduced-precision MXU passes for f32 matmuls.
        assert jnp.allclose(mu, mu_ref, atol=2e-3, rtol=2e-3), f"mu mismatch (B={B})"
        assert jnp.allclose(sigma, sigma_ref, atol=2e-3, rtol=2e-3), f"sigma mismatch (B={B})"

    print("KERNEL_OK")
</pallas_src>

<mosaic_0001>
module attributes {stable_mosaic.version = 11 : i64} {
  func.func @encoder_vae_kernel(%arg0: i32, %arg1: memref<1x128xf32, #tpu.memory_space<vmem>>, %arg2: memref<128x64xf32, #tpu.memory_space<vmem>>, %arg3: memref<1x64xf32, #tpu.memory_space<vmem>>, %arg4: memref<64x64xf32, #tpu.memory_space<vmem>>, %arg5: memref<1x64xf32, #tpu.memory_space<vmem>>, %arg6: memref<64x32xf32, #tpu.memory_space<vmem>>, %arg7: memref<1x32xf32, #tpu.memory_space<vmem>>, %arg8: memref<64x32xf32, #tpu.memory_space<vmem>>, %arg9: memref<1x32xf32, #tpu.memory_space<vmem>>, %arg10: memref<1x32xf32, #tpu.memory_space<vmem>>, %arg11: memref<1x32xf32, #tpu.memory_space<vmem>>) attributes {dimension_semantics = [#tpu.dimension_semantics<parallel>], iteration_bounds = array<i64: 1>, scalar_prefetch = 0 : i64, scratch_operands = 0 : i64, tpu.core_type = #tpu.core_type<tc>, window_params = [{transform_indices = @transform_0, window_bounds = array<i64: 1, 128>}, {pipeline_mode = #tpu.pipeline_mode<synchronous>, transform_indices = @transform_1, window_bounds = array<i64: 128, 64>}, {pipeline_mode = #tpu.pipeline_mode<synchronous>, transform_indices = @transform_2, window_bounds = array<i64: 1, 64>}, {pipeline_mode = #tpu.pipeline_mode<synchronous>, transform_indices = @transform_3, window_bounds = array<i64: 64, 64>}, {pipeline_mode = #tpu.pipeline_mode<synchronous>, transform_indices = @transform_4, window_bounds = array<i64: 1, 64>}, {pipeline_mode = #tpu.pipeline_mode<synchronous>, transform_indices = @transform_5, window_bounds = array<i64: 64, 32>}, {pipeline_mode = #tpu.pipeline_mode<synchronous>, transform_indices = @transform_6, window_bounds = array<i64: 1, 32>}, {pipeline_mode = #tpu.pipeline_mode<synchronous>, transform_indices = @transform_7, window_bounds = array<i64: 64, 32>}, {pipeline_mode = #tpu.pipeline_mode<synchronous>, transform_indices = @transform_8, window_bounds = array<i64: 1, 32>}, {transform_indices = @transform_9, window_bounds = array<i64: 1, 32>}, {transform_indices = @transform_10, window_bounds = array<i64: 1, 32>}]} {
    %c0 = arith.constant 0 : index
    %c0_0 = arith.constant 0 : index
    %0 = vector.load %arg1[%c0, %c0_0] : memref<1x128xf32, #tpu.memory_space<vmem>>, vector<1x128xf32>
    %c0_1 = arith.constant 0 : index
    %c0_2 = arith.constant 0 : index
    %1 = vector.load %arg2[%c0_1, %c0_2] : memref<128x64xf32, #tpu.memory_space<vmem>>, vector<128x64xf32>
    %cst = arith.constant dense<0.000000e+00> : vector<1x64xf32>
    %2 = tpu.matmul %0, %1, %cst {dimension_numbers = #tpu.dot_dimension_numbers<[1], [0], [0], [1], [0, 0, 1, 1], [], []>} : vector<1x128xf32>, vector<128x64xf32>, vector<1x64xf32> -> vector<1x64xf32>
    %c0_3 = arith.constant 0 : index
    %c0_4 = arith.constant 0 : index
    %3 = vector.load %arg3[%c0_3, %c0_4] : memref<1x64xf32, #tpu.memory_space<vmem>>, vector<1x64xf32>
    %4 = arith.addf %2, %3 : vector<1x64xf32>
    %cst_5 = arith.constant 0.000000e+00 : f32
    %5 = vector.broadcast %cst_5 : f32 to vector<1x64xf32>
    %6 = arith.cmpf ogt, %4, %5 : vector<1x64xf32>
    %cst_6 = arith.constant 0.000000e+00 : f32
    %7 = vector.broadcast %cst_6 : f32 to vector<1x64xf32>
    %8 = arith.minimumf %4, %7 : vector<1x64xf32>
    %9 = math.exp %8 : vector<1x64xf32>
    %cst_7 = arith.constant 1.000000e+00 : f32
    %10 = vector.broadcast %cst_7 : f32 to vector<1x64xf32>
    %11 = arith.subf %9, %10 : vector<1x64xf32>
    %cst_8 = arith.constant 1.67326319 : f32
    %12 = vector.broadcast %cst_8 : f32 to vector<1x64xf32>
    %13 = arith.mulf %12, %11 : vector<1x64xf32>
    %14 = arith.select %6, %4, %13 : vector<1x64xi1>, vector<1x64xf32>
    %cst_9 = arith.constant 1.05070102 : f32
    %15 = vector.broadcast %cst_9 : f32 to vector<1x64xf32>
    %16 = arith.mulf %15, %14 : vector<1x64xf32>
    %c0_10 = arith.constant 0 : index
    %c0_11 = arith.constant 0 : index
    %17 = vector.load %arg4[%c0_10, %c0_11] : memref<64x64xf32, #tpu.memory_space<vmem>>, vector<64x64xf32>
    %cst_12 = arith.constant dense<0.000000e+00> : vector<1x64xf32>
    %18 = tpu.matmul %16, %17, %cst_12 {dimension_numbers = #tpu.dot_dimension_numbers<[1], [0], [0], [1], [0, 0, 1, 1], [], []>} : vector<1x64xf32>, vector<64x64xf32>, vector<1x64xf32> -> vector<1x64xf32>
    %c0_13 = arith.constant 0 : index
    %c0_14 = arith.constant 0 : index
    %19 = vector.load %arg5[%c0_13, %c0_14] : memref<1x64xf32, #tpu.memory_space<vmem>>, vector<1x64xf32>
    %20 = arith.addf %18, %19 : vector<1x64xf32>
    %cst_15 = arith.constant 0.000000e+00 : f32
    %21 = vector.broadcast %cst_15 : f32 to vector<1x64xf32>
    %22 = arith.cmpf ogt, %20, %21 : vector<1x64xf32>
    %cst_16 = arith.constant 0.000000e+00 : f32
    %23 = vector.broadcast %cst_16 : f32 to vector<1x64xf32>
    %24 = arith.minimumf %20, %23 : vector<1x64xf32>
    %25 = math.exp %24 : vector<1x64xf32>
    %cst_17 = arith.constant 1.000000e+00 : f32
    %26 = vector.broadcast %cst_17 : f32 to vector<1x64xf32>
    %27 = arith.subf %25, %26 : vector<1x64xf32>
    %cst_18 = arith.constant 1.67326319 : f32
    %28 = vector.broadcast %cst_18 : f32 to vector<1x64xf32>
    %29 = arith.mulf %28, %27 : vector<1x64xf32>
    %30 = arith.select %22, %20, %29 : vector<1x64xi1>, vector<1x64xf32>
    %cst_19 = arith.constant 1.05070102 : f32
    %31 = vector.broadcast %cst_19 : f32 to vector<1x64xf32>
    %32 = arith.mulf %31, %30 : vector<1x64xf32>
    %c0_20 = arith.constant 0 : index
    %c0_21 = arith.constant 0 : index
    %33 = vector.load %arg6[%c0_20, %c0_21] : memref<64x32xf32, #tpu.memory_space<vmem>>, vector<64x32xf32>
    %cst_22 = arith.constant dense<0.000000e+00> : vector<1x32xf32>
    %34 = tpu.matmul %32, %33, %cst_22 {dimension_numbers = #tpu.dot_dimension_numbers<[1], [0], [0], [1], [0, 0, 1, 1], [], []>} : vector<1x64xf32>, vector<64x32xf32>, vector<1x32xf32> -> vector<1x32xf32>
    %c0_23 = arith.constant 0 : index
    %c0_24 = arith.constant 0 : index
    %35 = vector.load %arg7[%c0_23, %c0_24] : memref<1x32xf32, #tpu.memory_space<vmem>>, vector<1x32xf32>
    %36 = arith.addf %34, %35 : vector<1x32xf32>
    %c0_25 = arith.constant 0 : index
    %c0_26 = arith.constant 0 : index
    %37 = vector.load %arg10[%c0_25, %c0_26] : memref<1x32xf32, #tpu.memory_space<vmem>>, vector<1x32xf32>
    tpu.vector_store %arg10[%c0_25, %c0_26], %36 {strides = array<i32>} : memref<1x32xf32, #tpu.memory_space<vmem>>, vector<1x32xf32>,
    %c0_27 = arith.constant 0 : index
    %c0_28 = arith.constant 0 : index
    %38 = vector.load %arg8[%c0_27, %c0_28] : memref<64x32xf32, #tpu.memory_space<vmem>>, vector<64x32xf32>
    %cst_29 = arith.constant dense<0.000000e+00> : vector<1x32xf32>
    %39 = tpu.matmul %32, %38, %cst_29 {dimension_numbers = #tpu.dot_dimension_numbers<[1], [0], [0], [1], [0, 0, 1, 1], [], []>} : vector<1x64xf32>, vector<64x32xf32>, vector<1x32xf32> -> vector<1x32xf32>
    %c0_30 = arith.constant 0 : index
    %c0_31 = arith.constant 0 : index
    %40 = vector.load %arg9[%c0_30, %c0_31] : memref<1x32xf32, #tpu.memory_space<vmem>>, vector<1x32xf32>
    %41 = arith.addf %39, %40 : vector<1x32xf32>
    %cst_32 = arith.constant 2.000000e+01 : f32
    %42 = vector.broadcast %cst_32 : f32 to vector<1x32xf32>
    %43 = arith.cmpf ogt, %41, %42 : vector<1x32xf32>
    %cst_33 = arith.constant 2.000000e+01 : f32
    %44 = vector.broadcast %cst_33 : f32 to vector<1x32xf32>
    %45 = arith.minimumf %41, %44 : vector<1x32xf32>
    %46 = math.exp %45 : vector<1x32xf32>
    %47 = math.log1p %46 : vector<1x32xf32>
    %48 = arith.select %43, %41, %47 : vector<1x32xi1>, vector<1x32xf32>
    %c0_34 = arith.constant 0 : index
    %c0_35 = arith.constant 0 : index
    %49 = vector.load %arg11[%c0_34, %c0_35] : memref<1x32xf32, #tpu.memory_space<vmem>>, vector<1x32xf32>
    tpu.vector_store %arg11[%c0_34, %c0_35], %48 {strides = array<i32>} : memref<1x32xf32, #tpu.memory_space<vmem>>, vector<1x32xf32>,
    return
  }
  func.func @transform_0(%arg0: i32) -> (i32, i32) {
    %c0_i32 = arith.constant 0 : i32
    %c0_i32_0 = arith.constant 0 : i32
    return %arg0, %c0_i32 : i32, i32
  }
  func.func @transform_1(%arg0: i32) -> (i32, i32) {
    %c0_i32 = arith.constant 0 : i32
    %c0_i32_0 = arith.constant 0 : i32
    %c0_i32_1 = arith.constant 0 : i32
    return %c0_i32, %c0_i32_0 : i32, i32
  }
  func.func @transform_2(%arg0: i32) -> (i32, i32) {
    %c0_i32 = arith.constant 0 : i32
    %c0_i32_0 = arith.constant 0 : i32
    %c0_i32_1 = arith.constant 0 : i32
    return %c0_i32, %c0_i32_0 : i32, i32
  }
  func.func @transform_3(%arg0: i32) -> (i32, i32) {
    %c0_i32 = arith.constant 0 : i32
    %c0_i32_0 = arith.constant 0 : i32
    %c0_i32_1 = arith.constant 0 : i32
    return %c0_i32, %c0_i32_0 : i32, i32
  }
  func.func @transform_4(%arg0: i32) -> (i32, i32) {
    %c0_i32 = arith.constant 0 : i32
    %c0_i32_0 = arith.constant 0 : i32
    %c0_i32_1 = arith.constant 0 : i32
    return %c0_i32, %c0_i32_0 : i32, i32
  }
  func.func @transform_5(%arg0: i32) -> (i32, i32) {
    %c0_i32 = arith.constant 0 : i32
    %c0_i32_0 = arith.constant 0 : i32
    %c0_i32_1 = arith.constant 0 : i32
    return %c0_i32, %c0_i32_0 : i32, i32
  }
  func.func @transform_6(%arg0: i32) -> (i32, i32) {
    %c0_i32 = arith.constant 0 : i32
    %c0_i32_0 = arith.constant 0 : i32
    %c0_i32_1 = arith.constant 0 : i32
    return %c0_i32, %c0_i32_0 : i32, i32
  }
  func.func @transform_7(%arg0: i32) -> (i32, i32) {
    %c0_i32 = arith.constant 0 : i32
    %c0_i32_0 = arith.constant 0 : i32
    %c0_i32_1 = arith.constant 0 : i32
    return %c0_i32, %c0_i32_0 : i32, i32
  }
  func.func @transform_8(%arg0: i32) -> (i32, i32) {
    %c0_i32 = arith.constant 0 : i32
    %c0_i32_0 = arith.constant 0 : i32
    %c0_i32_1 = arith.constant 0 : i32
    return %c0_i32, %c0_i32_0 : i32, i32
  }
  func.func @transform_9(%arg0: i32) -> (i32, i32) {
    %c0_i32 = arith.constant 0 : i32
    %c0_i32_0 = arith.constant 0 : i32
    return %arg0, %c0_i32 : i32, i32
  }
  func.func @transform_10(%arg0: i32) -> (i32, i32) {
    %c0_i32 = arith.constant 0 : i32
    %c0_i32_0 = arith.constant 0 : i32
    return %arg0, %c0_i32 : i32, i32
  }
}

</mosaic_0001>

<llo_original>
// kernel: tile.23
$region0: #{tile.23}
  #allocation0 [shape = 's32[1]{0}', space=sflag, size = 0x4, scoped, tag = 'scoped memory for tile.23']
  %s0 = inlined_call_operand.vmem [shape: f32[8], index: 0, kind: input, shape index: {}]
  %s1 = inlined_call_operand.vmem [shape: f32[8,8], index: 1, kind: output, shape index: {}]
  // Predicated region
  $region2: #{tile.23} parent=0 // pred_check
    _
  $region3: #{tile.23} parent=0 // pred_check_branch
    %3 = sbr.rel (0) target = $region5
  $region4: #{tile.23} parent=0 // pred_region
    _
  $region5: #{tile.23} parent=0 // pred_fallthru
    _
  %v4 = vld [vmem:[%s0] ss:$0 sm:$0xff]
  %5 = vst [vmem:[%s1] sm:$0xff] %v4

// kernel: tile.24
$region0: #{tile.24}
  %s0 = inlined_call_operand.vmem [shape: f32[8,8], index: 0, kind: input, shape index: {}]
  %s1 = inlined_call_operand.vmem [shape: f32[1,64], index: 1, kind: output, shape index: {}]
  $region1: #{tile.24} parent=0
    #allocation0 [shape = 'u8[4096]{0}', space=vmem, size = 0x1000, scoped, tag = 'scoped mem for output reshape']
    %v2 = vld [vmem:[%s0] sm:$0x1]
    %vm3 = vcmask 64512
    %4 = vst.msk [vmem:[#allocation0] sm:$0x1] %vm3, %v2
    %s5 = scalar_lea.vmem %s0, 7
    %v6 = vld [vmem:[%s5] sm:$0x1]
    %7 = vrot.lane.b32.xlu0 %v6, 56
    %v8 = vpop.permute.xlu0 %7
    %vm9 = vcmask 523712
    %10 = vst.msk [vmem:[#allocation0] sm:$0x1] %vm9, %v8
    %s11 = scalar_lea.vmem %s0, 6
    %v12 = vld [vmem:[%s11] sm:$0x1]
    %13 = vrot.lane.b32.xlu0 %v12, 48
    %v14 = vpop.permute.xlu0 %13
    %vm15 = vcmask 458112
    %16 = vst.msk [vmem:[#allocation0] sm:$0x1] %vm15, %v14
    %s17 = scalar_lea.vmem %s0, 5
    %v18 = vld [vmem:[%s17] sm:$0x1]
    %19 = vrot.lane.b32.xlu0 %v18, 40
    %v20 = vpop.permute.xlu0 %19
    %vm21 = vcmask 392512
    %22 = vst.msk [vmem:[#allocation0] sm:$0x1] %vm21, %v20
    %s23 = scalar_lea.vmem %s0, 4
    %v24 = vld [vmem:[%s23] sm:$0x1]
    %25 = vrot.lane.b32.xlu0 %v24, 32
    %v26 = vpop.permute.xlu0 %25
    %vm27 = vcmask 326912
    %28 = vst.msk [vmem:[#allocation0] sm:$0x1] %vm27, %v26
    %s29 = scalar_lea.vmem %s0, 3
    %v30 = vld [vmem:[%s29] sm:$0x1]
    %31 = vrot.lane.b32.xlu0 %v30, 24
    %v32 = vpop.permute.xlu0 %31
    %vm33 = vcmask 261312
    %34 = vst.msk [vmem:[#allocation0] sm:$0x1] %vm33, %v32
    %s35 = scalar_lea.vmem %s0, 2
    %v36 = vld [vmem:[%s35] sm:$0x1]
    %37 = vrot.lane.b32.xlu0 %v36, 16
    %v38 = vpop.permute.xlu0 %37
    %vm39 = vcmask 195712
    %40 = vst.msk [vmem:[#allocation0] sm:$0x1] %vm39, %v38
    %s41 = scalar_lea.vmem %s0, 1
    %v42 = vld [vmem:[%s41] sm:$0x1]
    %43 = vrot.lane.b32.xlu0 %v42, 8
    %v44 = vpop.permute.xlu0 %43
    %vm45 = vcmask 130112
    %46 = vst.msk [vmem:[#allocation0] sm:$0x1] %vm45, %v44
    %s48 = sshllo.u32 0, 1
    %v50 = vld [vmem:[#allocation0] sm:%s48]
    %s51 = sshllo.u32 0, 1
    %52 = vst [vmem:[%s1] sm:%s51] %v50

// kernel: tile.33
$region0: #{tile.33}
  #allocation0 [shape = 's32[1]{0}', space=sflag, size = 0x4, scoped, tag = 'scoped memory for tile.33']
  %s0 = inlined_call_operand.vmem [shape: f32[4], index: 0, kind: input, shape index: {}]
  %s1 = inlined_call_operand.vmem [shape: f32[8,4], index: 1, kind: output, shape index: {}]
  // Predicated region
  $region2: #{tile.33} parent=0 // pred_check
    _
  $region3: #{tile.33} parent=0 // pred_check_branch
    %3 = sbr.rel (0) target = $region5
  $region4: #{tile.33} parent=0 // pred_region
    _
  $region5: #{tile.33} parent=0 // pred_fallthru
    _
  %v4 = vld [vmem:[%s0] ss:$0 sm:$0xff]
  %5 = vst [vmem:[%s1] sm:$0xff] %v4

// kernel: tile.34
$region0: #{tile.34}
  %s0 = inlined_call_operand.vmem [shape: f32[8,4], index: 0, kind: input, shape index: {}]
  %s1 = inlined_call_operand.vmem [shape: f32[1,32], index: 1, kind: output, shape index: {}]
  $region1: #{tile.34} parent=0
    #allocation0 [shape = 'u8[4096]{0}', space=vmem, size = 0x1000, scoped, tag = 'scoped mem for output reshape']
    %v2 = vld [vmem:[%s0] sm:$0x1]
    %vm3 = vcmask 31744
    %4 = vst.msk [vmem:[#allocation0] sm:$0x1] %vm3, %v2
    %s5 = scalar_lea.vmem %s0, 7
    %v6 = vld [vmem:[%s5] sm:$0x1]
    %7 = vrot.lane.b32.xlu0 %v6, 28
    %v8 = vpop.permute.xlu0 %7
    %vm9 = vcmask 261344
    %10 = vst.msk [vmem:[#allocation0] sm:$0x1] %vm9, %v8
    %s11 = scalar_lea.vmem %s0, 6
    %v12 = vld [vmem:[%s11] sm:$0x1]
    %13 = vrot.lane.b32.xlu0 %v12, 24
    %v14 = vpop.permute.xlu0 %13
    %vm15 = vcmask 228544
    %16 = vst.msk [vmem:[#allocation0] sm:$0x1] %vm15, %v14
    %s17 = scalar_lea.vmem %s0, 5
    %v18 = vld [vmem:[%s17] sm:$0x1]
    %19 = vrot.lane.b32.xlu0 %v18, 20
    %v20 = vpop.permute.xlu0 %19
    %vm21 = vcmask 195744
    %22 = vst.msk [vmem:[#allocation0] sm:$0x1] %vm21, %v20
    %s23 = scalar_lea.vmem %s0, 4
    %v24 = vld [vmem:[%s23] sm:$0x1]
    %25 = vrot.lane.b32.xlu0 %v24, 16
    %v26 = vpop.permute.xlu0 %25
    %vm27 = vcmask 162944
    %28 = vst.msk [vmem:[#allocation0] sm:$0x1] %vm27, %v26
    %s29 = scalar_lea.vmem %s0, 3
    %v30 = vld [vmem:[%s29] sm:$0x1]
    %31 = vrot.lane.b32.xlu0 %v30, 12
    %v32 = vpop.permute.xlu0 %31
    %vm33 = vcmask 130144
    %34 = vst.msk [vmem:[#allocation0] sm:$0x1] %vm33, %v32
    %s35 = scalar_lea.vmem %s0, 2
    %v36 = vld [vmem:[%s35] sm:$0x1]
    %37 = vrot.lane.b32.xlu0 %v36, 8
    %v38 = vpop.permute.xlu0 %37
    %vm39 = vcmask 97344
    %40 = vst.msk [vmem:[#allocation0] sm:$0x1] %vm39, %v38
    %s41 = scalar_lea.vmem %s0, 1
    %v42 = vld [vmem:[%s41] sm:$0x1]
    %43 = vrot.lane.b32.xlu0 %v42, 4
    %v44 = vpop.permute.xlu0 %43
    %vm45 = vcmask 64544
    %46 = vst.msk [vmem:[#allocation0] sm:$0x1] %vm45, %v44
    %s48 = sshllo.u32 0, 1
    %v50 = vld [vmem:[#allocation0] sm:%s48]
    %s51 = sshllo.u32 0, 1
    %52 = vst [vmem:[%s1] sm:%s51] %v50

// kernel: encoder_vae_forward.1
$region0: #{encoder_vae_forward.1}
  #allocation0 [shape = 'u32[]', space=smem, size = 0x4, offset = 0x4, fixed_abs, tag = 'smem constant byte address 0x4 - core index']
  #allocation1 [shape = 'u32[144,128]{1,0:T(1,128)}', space=vmem, size = 0x12000, scoped, tag = 'internal scratch']
  %s0 = inlined_call_operand.vmem [shape: f32[1,128], index: 0, kind: input, shape index: {}]
  %s1 = inlined_call_operand.vmem [shape: f32[128,64], index: 1, kind: input, shape index: {}]
  %s2 = inlined_call_operand.vmem [shape: f32[1,64], index: 2, kind: input, shape index: {}]
  %s3 = inlined_call_operand.vmem [shape: f32[64,64], index: 3, kind: input, shape index: {}]
  %s4 = inlined_call_operand.vmem [shape: f32[1,64], index: 4, kind: input, shape index: {}]
  %s5 = inlined_call_operand.vmem [shape: f32[64,32], index: 5, kind: input, shape index: {}]
  %s6 = inlined_call_operand.vmem [shape: f32[1,32], index: 6, kind: input, shape index: {}]
  %s7 = inlined_call_operand.vmem [shape: f32[64,32], index: 7, kind: input, shape index: {}]
  %s8 = inlined_call_operand.vmem [shape: f32[1,32], index: 8, kind: input, shape index: {}]
  %s9 = inlined_call_operand.vmem [shape: f32[1,32], index: 9, kind: output, shape index: {0}]
  %s10 = inlined_call_operand.vmem [shape: f32[1,32], index: 10, kind: output, shape index: {1}]
  %11 = xla_tuple %s9, %s10
  %s12 = sld [smem:[#allocation0]]
  $region54: #{encoder_vae_forward.1} parent=0
    _
  %s14 = ssub.s32 1, %s12
  %s15 = scalar_select 0, %s14, %s12
  // Predicated region
  $region2: #{encoder_vae_forward.1} parent=0 // pred_check
    _
  $region3: #{encoder_vae_forward.1} parent=0 // pred_check_branch
    %17 = sbr.rel (0) target = $region5
  $region4: #{encoder_vae_forward.1} parent=0 // pred_region
    _
  $region5: #{encoder_vae_forward.1} parent=0 // pred_fallthru
    _
  // Predicated region
  $region6: #{encoder_vae_forward.1} parent=0 // pred_check
    _
  $region7: #{encoder_vae_forward.1} parent=0 // pred_check_branch
    %19 = sbr.rel (0) target = $region9
  $region8: #{encoder_vae_forward.1} parent=0 // pred_region
    _
  $region9: #{encoder_vae_forward.1} parent=0 // pred_fallthru
    _
  // Predicated region
  $region10: #{encoder_vae_forward.1} parent=0 // pred_check
    _
  $region11: #{encoder_vae_forward.1} parent=0 // pred_check_branch
    %21 = sbr.rel (0) target = $region13
  $region12: #{encoder_vae_forward.1} parent=0 // pred_region
    _
  $region13: #{encoder_vae_forward.1} parent=0 // pred_fallthru
    _
  // Predicated region
  $region14: #{encoder_vae_forward.1} parent=0 // pred_check
    _
  $region15: #{encoder_vae_forward.1} parent=0 // pred_check_branch
    %23 = sbr.rel (0) target = $region17
  $region16: #{encoder_vae_forward.1} parent=0 // pred_region
    _
  $region17: #{encoder_vae_forward.1} parent=0 // pred_fallthru
    _
  // Predicated region
  $region18: #{encoder_vae_forward.1} parent=0 // pred_check
    _
  $region19: #{encoder_vae_forward.1} parent=0 // pred_check_branch
    %25 = sbr.rel (0) target = $region21
  $region20: #{encoder_vae_forward.1} parent=0 // pred_region
    _
  $region21: #{encoder_vae_forward.1} parent=0 // pred_fallthru
    _
  // Predicated region
  $region22: #{encoder_vae_forward.1} parent=0 // pred_check
    _
  $region23: #{encoder_vae_forward.1} parent=0 // pred_check_branch
    %27 = sbr.rel (0) target = $region25
  $region24: #{encoder_vae_forward.1} parent=0 // pred_region
    _
  $region25: #{encoder_vae_forward.1} parent=0 // pred_fallthru
    _
  // Predicated region
  $region26: #{encoder_vae_forward.1} parent=0 // pred_check
    _
  $region27: #{encoder_vae_forward.1} parent=0 // pred_check_branch
    %29 = sbr.rel (0) target = $region29
  $region28: #{encoder_vae_forward.1} parent=0 // pred_region
    _
  $region29: #{encoder_vae_forward.1} parent=0 // pred_fallthru
    _
  // Predicated region
  $region30: #{encoder_vae_forward.1} parent=0 // pred_check
    _
  $region31: #{encoder_vae_forward.1} parent=0 // pred_check_branch
    %31 = sbr.rel (0) target = $region33
  $region32: #{encoder_vae_forward.1} parent=0 // pred_region
    _
  $region33: #{encoder_vae_forward.1} parent=0 // pred_fallthru
    _
  // Predicated region
  $region34: #{encoder_vae_forward.1} parent=0 // pred_check
    _
  $region35: #{encoder_vae_forward.1} parent=0 // pred_check_branch
    %33 = sbr.rel (0) target = $region37
  $region36: #{encoder_vae_forward.1} parent=0 // pred_region
    _
  $region37: #{encoder_vae_forward.1} parent=0 // pred_fallthru
    _
  %v34 = vld [vmem:[%s0] sm:$0x1]
  %v35 = vld [vmem:[%s1] sm:$0xff]
  %v36 = vld [vmem:[%s1 + $0x8] sm:$0xff]
  %v37 = vld [vmem:[%s1 + $0x10] sm:$0xff]
  %v38 = vld [vmem:[%s1 + $0x18] sm:$0xff]
  %v39 = vld [vmem:[%s1 + $0x20] sm:$0xff]
  %v40 = vld [vmem:[%s1 + $0x28] sm:$0xff]
  %v41 = vld [vmem:[%s1 + $0x30] sm:$0xff]
  %v42 = vld [vmem:[%s1 + $0x38] sm:$0xff]
  %v43 = vld [vmem:[%s1 + $0x40] sm:$0xff]
  %v44 = vld [vmem:[%s1 + $0x48] sm:$0xff]
  %v45 = vld [vmem:[%s1 + $0x50] sm:$0xff]
  %v46 = vld [vmem:[%s1 + $0x58] sm:$0xff]
  %v47 = vld [vmem:[%s1 + $0x60] sm:$0xff]
  %v48 = vld [vmem:[%s1 + $0x68] sm:$0xff]
  %v49 = vld [vmem:[%s1 + $0x70] sm:$0xff]
  %v50 = vld [vmem:[%s1 + $0x78] sm:$0xff]
  %v51 = vld [vmem:[%s2] sm:$0x1]
  %52 = vmatprep.subr.mxu0 0.0
  %53 = vmatpush1.msra.mxu0 %v35
  %54 = vmatprep.subr.mxu0 0.0
  %55 = vmatpush1.msra.mxu0 %v36
  %56 = vmatprep.subr.mxu0 0.0
  %57 = vmatpush1.msra.mxu0 %v37
  %58 = vmatprep.subr.mxu0 0.0
  %59 = vmatpush1.msra.mxu0 %v38
  %60 = vmatprep.subr.mxu0 0.0
  %61 = vmatpush1.msra.mxu0 %v39
  %62 = vmatprep.subr.mxu0 0.0
  %63 = vmatpush1.msra.mxu0 %v40
  %64 = vmatprep.subr.mxu0 0.0
  %65 = vmatpush1.msra.mxu0 %v41
  %66 = vmatprep.subr.mxu0 0.0
  %67 = vmatpush1.msra.mxu0 %v42
  %68 = vmatprep.subr.mxu0 0.0
  %69 = vmatpush1.msra.mxu0 %v43
  %70 = vmatprep.subr.mxu0 0.0
  %71 = vmatpush1.msra.mxu0 %v44
  %72 = vmatprep.subr.mxu0 0.0
  %73 = vmatpush1.msra.mxu0 %v45
  %74 = vmatprep.subr.mxu0 0.0
  %75 = vmatpush1.msra.mxu0 %v46
  %76 = vmatprep.subr.mxu0 0.0
  %77 = vmatpush1.msra.mxu0 %v47
  %78 = vmatprep.subr.mxu0 0.0
  %79 = vmatpush1.msra.mxu0 %v48
  %80 = vmatprep.subr.mxu0 0.0
  %81 = vmatpush1.msra.mxu0 %v49
  %82 = vmatprep.subr.mxu0 0.0
  %83 = vmatpush1.msra.mxu0 %v50
  %84 = vmatprep.subr.mxu0 0.0
  %85 = vmatpush1.msra.mxu0 0.0
  %86 = vmatprep.subr.mxu0 0.0
  %87 = vmatpush1.msra.mxu0 0.0
  %88 = vmatprep.subr.mxu0 0.0
  %89 = vmatpush1.msra.mxu0 0.0
  %90 = vmatprep.subr.mxu0 0.0
  %91 = vmatpush1.msra.mxu0 0.0
  %92 = vmatprep.subr.mxu0 0.0
  %93 = vmatpush1.msra.mxu0 0.0
  %94 = vmatprep.subr.mxu0 0.0
  %95 = vmatpush1.msra.mxu0 0.0
  %96 = vmatprep.subr.mxu0 0.0
  %97 = vmatpush1.msra.mxu0 0.0
  %98 = vmatprep.subr.mxu0 0.0
  %99 = vmatpush1.msra.mxu0 0.0
  %100 = vmatprep.subr.mxu0 0.0
  %101 = vmatpush1.msra.mxu0 0.0
  %102 = vmatprep.subr.mxu0 0.0
  %103 = vmatpush1.msra.mxu0 0.0
  %104 = vmatprep.subr.mxu0 0.0
  %105 = vmatpush1.msra.mxu0 0.0
  %106 = vmatprep.subr.mxu0 0.0
  %107 = vmatpush1.msra.mxu0 0.0
  %108 = vmatprep.subr.mxu0 0.0
  %109 = vmatpush1.msra.mxu0 0.0
  %110 = vmatprep.subr.mxu0 0.0
  %111 = vmatpush1.msra.mxu0 0.0
  %112 = vmatprep.subr.mxu0 0.0
  %113 = vmatpush1.msra.mxu0 0.0
  %114 = vmatprep.subr.mxu0 0.0
  %115 = vmatpush1.msra.mxu0 0.0
  %116 = vmatprep.mubr.f32.mxu0 0.0
  %117 = vmatmul.mubr.f32.gmra.mrb[0].mxu0 %v34
  %v118 = vpop.f32.mrb[0].mxu0
  %v119 = vadd.f32 %v51, %v118
  %v120 = vpop.f32.mrb[0].mxu0
  %121 = vdwg.mxu0
  %vm122 = vcmp.gt.f32.partialorder %v119, 0.0
  %v123 = vmin.f32 %v119, 0.0
  %v124 = vmul.f32 %v123, 1.442695
  %v125 = vpow.pop %v124
  %v126 = vsub.f32 %v125, 1.0
  %v127 = vmul.f32 %v126, 1.6732632
  %v128 = vsel %vm122, %v119, %v127
  %v129 = vmul.f32 %v128, 1.050701
  %v130 = vld [vmem:[%s3] sm:$0xff]
  %v131 = vld [vmem:[%s3 + $0x8] sm:$0xff]
  %v132 = vld [vmem:[%s3 + $0x10] sm:$0xff]
  %v133 = vld [vmem:[%s3 + $0x18] sm:$0xff]
  %v134 = vld [vmem:[%s3 + $0x20] sm:$0xff]
  %v135 = vld [vmem:[%s3 + $0x28] sm:$0xff]
  %v136 = vld [vmem:[%s3 + $0x30] sm:$0xff]
  %v137 = vld [vmem:[%s3 + $0x38] sm:$0xff]
  %v138 = vld [vmem:[%s4] sm:$0x1]
  %vm139 = vcmask 523264
  %v141 = vsel %vm139, %v129, 0
  %143 = vmatprep.subr.mxu0 0.0
  %144 = vmatpush1.msra.mxu0 %v130
  %145 = vmatprep.subr.mxu0 0.0
  %146 = vmatpush1.msra.mxu0 %v131
  %147 = vmatprep.subr.mxu0 0.0
  %148 = vmatpush1.msra.mxu0 %v132
  %149 = vmatprep.subr.mxu0 0.0
  %150 = vmatpush1.msra.mxu0 %v133
  %151 = vmatprep.subr.mxu0 0.0
  %152 = vmatpush1.msra.mxu0 %v134
  %153 = vmatprep.subr.mxu0 0.0
  %154 = vmatpush1.msra.mxu0 %v135
  %155 = vmatprep.subr.mxu0 0.0
  %156 = vmatpush1.msra.mxu0 %v136
  %157 = vmatprep.subr.mxu0 0.0
  %158 = vmatpush1.msra.mxu0 %v137
  %159 = vmatprep.subr.mxu0 0.0
  %160 = vmatpush1.msra.mxu0 0.0
  %161 = vmatprep.subr.mxu0 0.0
  %162 = vmatpush1.msra.mxu0 0.0
  %163 = vmatprep.subr.mxu0 0.0
  %164 = vmatpush1.msra.mxu0 0.0
  %165 = vmatprep.subr.mxu0 0.0
  %166 = vmatpush1.msra.mxu0 0.0
  %167 = vmatprep.subr.mxu0 0.0
  %168 = vmatpush1.msra.mxu0 0.0
  %169 = vmatprep.subr.mxu0 0.0
  %170 = vmatpush1.msra.mxu0 0.0
  %171 = vmatprep.subr.mxu0 0.0
  %172 = vmatpush1.msra.mxu0 0.0
  %173 = vmatprep.subr.mxu0 0.0
  %174 = vmatpush1.msra.mxu0 0.0
  %175 = vmatprep.subr.mxu0 0.0
  %176 = vmatpush1.msra.mxu0 0.0
  %177 = vmatprep.subr.mxu0 0.0
  %178 = vmatpush1.msra.mxu0 0.0
  %179 = vmatprep.subr.mxu0 0.0
  %180 = vmatpush1.msra.mxu0 0.0
  %181 = vmatprep.subr.mxu0 0.0
  %182 = vmatpush1.msra.mxu0 0.0
  %183 = vmatprep.subr.mxu0 0.0
  %184 = vmatpush1.msra.mxu0 0.0
  %185 = vmatprep.subr.mxu0 0.0
  %186 = vmatpush1.msra.mxu0 0.0
  %187 = vmatprep.subr.mxu0 0.0
  %188 = vmatpush1.msra.mxu0 0.0
  %189 = vmatprep.subr.mxu0 0.0
  %190 = vmatpush1.msra.mxu0 0.0
  %191 = vmatprep.subr.mxu0 0.0
  %192 = vmatpush1.msra.mxu0 0.0
  %193 = vmatprep.subr.mxu0 0.0
  %194 = vmatpush1.msra.mxu0 0.0
  %195 = vmatprep.subr.mxu0 0.0
  %196 = vmatpush1.msra.mxu0 0.0
  %197 = vmatprep.subr.mxu0 0.0
  %198 = vmatpush1.msra.mxu0 0.0
  %199 = vmatprep.subr.mxu0 0.0
  %200 = vmatpush1.msra.mxu0 0.0
  %201 = vmatprep.subr.mxu0 0.0
  %202 = vmatpush1.msra.mxu0 0.0
  %203 = vmatprep.subr.mxu0 0.0
  %204 = vmatpush1.msra.mxu0 0.0
  %205 = vmatprep.subr.mxu0 0.0
  %206 = vmatpush1.msra.mxu0 0.0
  %207 = vmatprep.mubr.f32.mxu0 0.0
  %208 = vmatmul.mubr.f32.gmra.mrb[0].mxu0 %v141
  %v209 = vpop.f32.mrb[0].mxu0
  %v210 = vadd.f32 %v138, %v209
  %v211 = vpop.f32.mrb[0].mxu0
  %212 = vdwg.mxu0
  %vm213 = vcmp.gt.f32.partialorder %v210, 0.0
  %v214 = vmin.f32 %v210, 0.0
  %v215 = vmul.f32 %v214, 1.442695
  %v216 = vpow.pop %v215
  %v217 = vsub.f32 %v216, 1.0
  %v218 = vmul.f32 %v217, 1.6732632
  %v219 = vsel %vm213, %v210, %v218
  %v220 = vmul.f32 %v219, 1.050701
  %v221 = vld [vmem:[%s5] sm:$0xff]
  %v222 = vld [vmem:[%s5 + $0x8] sm:$0xff]
  %v223 = vld [vmem:[%s5 + $0x10] sm:$0xff]
  %v224 = vld [vmem:[%s5 + $0x18] sm:$0xff]
  %v225 = vld [vmem:[%s5 + $0x20] sm:$0xff]
  %v226 = vld [vmem:[%s5 + $0x28] sm:$0xff]
  %v227 = vld [vmem:[%s5 + $0x30] sm:$0xff]
  %v228 = vld [vmem:[%s5 + $0x38] sm:$0xff]
  %v229 = vld [vmem:[%s6] sm:$0x1]
  %v231 = vsel %vm139, %v220, 0
  %233 = vmatprep.subr.mxu0 0.0
  %234 = vmatpush1.msra.mxu0 %v221
  %235 = vmatprep.subr.mxu0 0.0
  %236 = vmatpush1.msra.mxu0 %v222
  %237 = vmatprep.subr.mxu0 0.0
  %238 = vmatpush1.msra.mxu0 %v223
  %239 = vmatprep.subr.mxu0 0.0
  %240 = vmatpush1.msra.mxu0 %v224
  %241 = vmatprep.subr.mxu0 0.0
  %242 = vmatpush1.msra.mxu0 %v225
  %243 = vmatprep.subr.mxu0 0.0
  %244 = vmatpush1.msra.mxu0 %v226
  %245 = vmatprep.subr.mxu0 0.0
  %246 = vmatpush1.msra.mxu0 %v227
  %247 = vmatprep.subr.mxu0 0.0
  %248 = vmatpush1.msra.mxu0 %v228
  %249 = vmatprep.subr.mxu0 0.0
  %250 = vmatpush1.msra.mxu0 0.0
  %251 = vmatprep.subr.mxu0 0.0
  %252 = vmatpush1.msra.mxu0 0.0
  %253 = vmatprep.subr.mxu0 0.0
  %254 = vmatpush1.msra.mxu0 0.0
  %255 = vmatprep.subr.mxu0 0.0
  %256 = vmatpush1.msra.mxu0 0.0
  %257 = vmatprep.subr.mxu0 0.0
  %258 = vmatpush1.msra.mxu0 0.0
  %259 = vmatprep.subr.mxu0 0.0
  %260 = vmatpush1.msra.mxu0 0.0
  %261 = vmatprep.subr.mxu0 0.0
  %262 = vmatpush1.msra.mxu0 0.0
  %263 = vmatprep.subr.mxu0 0.0
  %264 = vmatpush1.msra.mxu0 0.0
  %265 = vmatprep.subr.mxu0 0.0
  %266 = vmatpush1.msra.mxu0 0.0
  %267 = vmatprep.subr.mxu0 0.0
  %268 = vmatpush1.msra.mxu0 0.0
  %269 = vmatprep.subr.mxu0 0.0
  %270 = vmatpush1.msra.mxu0 0.0
  %271 = vmatprep.subr.mxu0 0.0
  %272 = vmatpush1.msra.mxu0 0.0
  %273 = vmatprep.subr.mxu0 0.0
  %274 = vmatpush1.msra.mxu0 0.0
  %275 = vmatprep.subr.mxu0 0.0
  %276 = vmatpush1.msra.mxu0 0.0
  %277 = vmatprep.subr.mxu0 0.0
  %278 = vmatpush1.msra.mxu0 0.0
  %279 = vmatprep.subr.mxu0 0.0
  %280 = vmatpush1.msra.mxu0 0.0
  %281 = vmatprep.subr.mxu0 0.0
  %282 = vmatpush1.msra.mxu0 0.0
  %283 = vmatprep.subr.mxu0 0.0
  %284 = vmatpush1.msra.mxu0 0.0
  %285 = vmatprep.subr.mxu0 0.0
  %286 = vmatpush1.msra.mxu0 0.0
  %287 = vmatprep.subr.mxu0 0.0
  %288 = vmatpush1.msra.mxu0 0.0
  %289 = vmatprep.subr.mxu0 0.0
  %290 = vmatpush1.msra.mxu0 0.0
  %291 = vmatprep.subr.mxu0 0.0
  %292 = vmatpush1.msra.mxu0 0.0
  %293 = vmatprep.subr.mxu0 0.0
  %294 = vmatpush1.msra.mxu0 0.0
  %295 = vmatprep.subr.mxu0 0.0
  %296 = vmatpush1.msra.mxu0 0.0
  %297 = vmatprep.mubr.f32.mxu0 0.0
  %298 = vmatmul.mubr.f32.gmra.mrb[0].mxu0 %v231
  %v299 = vpop.f32.mrb[0].mxu0
  %v300 = vadd.f32 %v229, %v299
  %v301 = vpop.f32.mrb[0].mxu0
  %302 = vdwg.mxu0
  %vm303 = vcmask 253952
  %304 = vst.msk [vmem:[%s9] sm:$0x1] %vm303, %v300
  %v305 = vld [vmem:[%s7] sm:$0xff]
  %v306 = vld [vmem:[%s7 + $0x8] sm:$0xff]
  %v307 = vld [vmem:[%s7 + $0x10] sm:$0xff]
  %v308 = vld [vmem:[%s7 + $0x18] sm:$0xff]
  %v309 = vld [vmem:[%s7 + $0x20] sm:$0xff]
  %v310 = vld [vmem:[%s7 + $0x28] sm:$0xff]
  %v311 = vld [vmem:[%s7 + $0x30] sm:$0xff]
  %v312 = vld [vmem:[%s7 + $0x38] sm:$0xff]
  %v313 = vld [vmem:[%s8] sm:$0x1]
  %314 = vmatprep.subr.mxu0 0.0
  %315 = vmatpush1.msra.mxu0 %v305
  %316 = vmatprep.subr.mxu0 0.0
  %317 = vmatpush1.msra.mxu0 %v306
  %318 = vmatprep.subr.mxu0 0.0
  %319 = vmatpush1.msra.mxu0 %v307
  %320 = vmatprep.subr.mxu0 0.0
  %321 = vmatpush1.msra.mxu0 %v308
  %322 = vmatprep.subr.mxu0 0.0
  %323 = vmatpush1.msra.mxu0 %v309
  %324 = vmatprep.subr.mxu0 0.0
  %325 = vmatpush1.msra.mxu0 %v310
  %326 = vmatprep.subr.mxu0 0.0
  %327 = vmatpush1.msra.mxu0 %v311
  %328 = vmatprep.subr.mxu0 0.0
  %329 = vmatpush1.msra.mxu0 %v312
  %330 = vmatprep.subr.mxu0 0.0
  %331 = vmatpush1.msra.mxu0 0.0
  %332 = vmatprep.subr.mxu0 0.0
  %333 = vmatpush1.msra.mxu0 0.0
  %334 = vmatprep.subr.mxu0 0.0
  %335 = vmatpush1.msra.mxu0 0.0
  %336 = vmatprep.subr.mxu0 0.0
  %337 = vmatpush1.msra.mxu0 0.0
  %338 = vmatprep.subr.mxu0 0.0
  %339 = vmatpush1.msra.mxu0 0.0
  %340 = vmatprep.subr.mxu0 0.0
  %341 = vmatpush1.msra.mxu0 0.0
  %342 = vmatprep.subr.mxu0 0.0
  %343 = vmatpush1.msra.mxu0 0.0
  %344 = vmatprep.subr.mxu0 0.0
  %345 = vmatpush1.msra.mxu0 0.0
  %346 = vmatprep.subr.mxu0 0.0
  %347 = vmatpush1.msra.mxu0 0.0
  %348 = vmatprep.subr.mxu0 0.0
  %349 = vmatpush1.msra.mxu0 0.0
  %350 = vmatprep.subr.mxu0 0.0
  %351 = vmatpush1.msra.mxu0 0.0
  %352 = vmatprep.subr.mxu0 0.0
  %353 = vmatpush1.msra.mxu0 0.0
  %354 = vmatprep.subr.mxu0 0.0
  %355 = vmatpush1.msra.mxu0 0.0
  %356 = vmatprep.subr.mxu0 0.0
  %357 = vmatpush1.msra.mxu0 0.0
  %358 = vmatprep.subr.mxu0 0.0
  %359 = vmatpush1.msra.mxu0 0.0
  %360 = vmatprep.subr.mxu0 0.0
  %361 = vmatpush1.msra.mxu0 0.0
  %362 = vmatprep.subr.mxu0 0.0
  %363 = vmatpush1.msra.mxu0 0.0
  %364 = vmatprep.subr.mxu0 0.0
  %365 = vmatpush1.msra.mxu0 0.0
  %366 = vmatprep.subr.mxu0 0.0
  %367 = vmatpush1.msra.mxu0 0.0
  %368 = vmatprep.subr.mxu0 0.0
  %369 = vmatpush1.msra.mxu0 0.0
  %370 = vmatprep.subr.mxu0 0.0
  %371 = vmatpush1.msra.mxu0 0.0
  %372 = vmatprep.subr.mxu0 0.0
  %373 = vmatpush1.msra.mxu0 0.0
  %374 = vmatprep.subr.mxu0 0.0
  %375 = vmatpush1.msra.mxu0 0.0
  %376 = vmatprep.subr.mxu0 0.0
  %377 = vmatpush1.msra.mxu0 0.0
  %378 = vmatprep.mubr.f32.mxu0 0.0
  %379 = vmatmul.mubr.f32.gmra.mrb[0].mxu0 %v231
  %v380 = vpop.f32.mrb[0].mxu0
  %v381 = vadd.f32 %v313, %v380
  %v382 = vpop.f32.mrb[0].mxu0
  %383 = vdwg.mxu0
  %vm384 = vcmp.gt.f32.partialorder %v381, 20.0
  %v385 = vmin.f32 %v381, 20.0
  %v386 = vmul.f32 %v385, 1.442695
  %v387 = vpow.pop %v386
  %v388 = vadd.f32 %v387, 1.0
  %v389 = vlog2.pop %v388
  %v390 = vmul.f32 %v389, 0.6931472
  %v391 = vmul.f32 -0.5, %v387
  %v392 = vadd.f32 %v391, 1.0
  %v393 = vmul.f32 %v392, %v387
  %v394 = vand.u32 2147483647, %v387
  %vm395 = vcmp.lt.f32.partialorder %v394, 0.0004427343
  %v396 = vsel %vm395, %v393, %v390
  %v397 = vsel %vm384, %v381, %v396
  %398 = vst.msk [vmem:[%s10] sm:$0x1] %vm303, %v397
  // Predicated region
  $region38: #{encoder_vae_forward.1} parent=0 // pred_check
    _
  $region39: #{encoder_vae_forward.1} parent=0 // pred_check_branch
    %400 = sbr.rel (0) target = $region41
  $region40: #{encoder_vae_forward.1} parent=0 // pred_region
    _
  $region41: #{encoder_vae_forward.1} parent=0 // pred_fallthru
    _
  // Predicated region
  $region42: #{encoder_vae_forward.1} parent=0 // pred_check
    _
  $region43: #{encoder_vae_forward.1} parent=0 // pred_check_branch
    %402 = sbr.rel (0) target = $region45
  $region44: #{encoder_vae_forward.1} parent=0 // pred_region
    _
  $region45: #{encoder_vae_forward.1} parent=0 // pred_fallthru
    _
  // Predicated region
  $region46: #{encoder_vae_forward.1} parent=0 // pred_check
    _
  $region47: #{encoder_vae_forward.1} parent=0 // pred_check_branch
    %404 = sbr.rel (0) target = $region49
  $region48: #{encoder_vae_forward.1} parent=0 // pred_region
    _
  $region49: #{encoder_vae_forward.1} parent=0 // pred_fallthru
    _
  // Predicated region
  $region50: #{encoder_vae_forward.1} parent=0 // pred_check
    _
  $region51: #{encoder_vae_forward.1} parent=0 // pred_check_branch
    %406 = sbr.rel (0) target = $region53
  $region52: #{encoder_vae_forward.1} parent=0 // pred_region
    _
  $region53: #{encoder_vae_forward.1} parent=0 // pred_fallthru
    _

</llo_original>
